<compile_context>
chip_gen: v6e
topology: v6e:2x2x1
jax: 0.10.0
libtpu: 0.0.40
codegen_flags: <defaults>
</compile_context>

<pallas_src>
import jax
import jax.numpy as jnp
from jax import lax
from jax.experimental import pallas as pl
from jax.experimental.pallas import tpu as pltpu


_INV_SQRT2 = 0.7071067811865476  # 1/sqrt(2)


# ----------------------------- in-kernel math -----------------------------

def _gelu_exact(x):
    # nn.GELU() default = exact erf formulation (kept for PyTorch parity).
    return 0.5 * x * (1.0 + lax.erf(x * _INV_SQRT2))


def _layernorm(x, gamma, beta, eps=1e-5):
    # Folded affine: s = gamma * rsqrt(var+eps); y = x*s + (beta - mean*s).
    mean = jnp.mean(x, axis=-1, keepdims=True)
    var = jnp.mean((x - mean) ** 2, axis=-1, keepdims=True)
    s = gamma * lax.rsqrt(var + eps)
    return x * s + (beta - mean * s)


def decoder_kernel(z_ref,
                   w1_ref, b1_ref, g1_ref, be1_ref,
                   w2_ref, b2_ref, g2_ref, be2_ref,
                   w5_ref, b5_ref,
                   out_ref):
    z = z_ref[...].astype(jnp.float32)

    # body1: Linear -> LayerNorm -> GELU
    h = jnp.dot(z, w1_ref[...], preferred_element_type=jnp.float32) + b1_ref[...]
    h = _gelu_exact(_layernorm(h, g1_ref[...], be1_ref[...]))

    # body2: Linear -> LayerNorm -> GELU
    h = jnp.dot(h, w2_ref[...], preferred_element_type=jnp.float32) + b2_ref[...]
    h = _gelu_exact(_layernorm(h, g2_ref[...], be2_ref[...]))

    # body5: Linear only
    y = jnp.dot(h, w5_ref[...], preferred_element_type=jnp.float32) + b5_ref[...]
    out_ref[...] = y.astype(out_ref.dtype)


# ------------------------------ wrappers -------------------------------------

_PARAM_ORDER = ("w1", "b1", "g1", "be1", "w2", "b2", "g2", "be2", "w5", "b5")


def _param_list(params):
    return [params[k] for k in _PARAM_ORDER]


def decoder_forward_pallas(z, params, *, batch_tile=512):
    """xhat = body5(body2(body1(z))) as a single fused Pallas kernel."""
    B, Dz = z.shape
    out_dim = params["w5"].shape[1]
    plist = _param_list(params)

    if B > batch_tile and B % batch_tile == 0:
        # Batch-tiled path: z / out tiled over the batch, all weights /
        # biases / LN params VMEM-resident across grid steps (constant
        # index_map). "parallel" lets v7x shard the batch across both TCs.
        in_specs = [pl.BlockSpec((batch_tile, Dz), lambda i: (i, 0))]
        in_specs += [pl.BlockSpec(p.shape, lambda i: (0, 0)) for p in plist]
        out_specs = pl.BlockSpec((batch_tile, out_dim), lambda i: (i, 0))
        return pl.pallas_call(
            decoder_kernel,
            out_shape=jax.ShapeDtypeStruct((B, out_dim), jnp.float32),
            grid=(B // batch_tile,),
            in_specs=in_specs,
            out_specs=out_specs,
            compiler_params=pltpu.CompilerParams(
                dimension_semantics=("parallel",)),
        )(z, *plist)

    # Small / irregular batch: no grid at all (no pipeline prologue/epilogue,
    # no per-step bookkeeping) — everything lives in VMEM for one invocation.
    vmem = pltpu.MemorySpace.VMEM
    return pl.pallas_call(
        decoder_kernel,
        out_shape=jax.ShapeDtypeStruct((B, out_dim), jnp.float32),
        in_specs=[pl.BlockSpec(memory_space=vmem)] * (1 + len(plist)),
        out_specs=pl.BlockSpec(memory_space=vmem),
    )(z, *plist)


def make_decoder_forward(feature_type_dict):
    """Returns a jitted forward(z, t, params) -> (gauss, cat_list).

    The feature_type_dict slicing is static and compiled into the jit; all
    slicing happens on the single contiguous, lane-dense xhat output.
    """
    rd = tuple(feature_type_dict["real_data"])
    bins = tuple(tuple(v) for v in feature_type_dict["binary_param"])
    cats = tuple(tuple(v) for v in feature_type_dict["categorical_one_hot"])

    @jax.jit
    def fwd(z, t, params):
        # The original forward computes time_embedding(t) (with a freshly
        # initialized nn.Linear each call) and concatenates it to z, but the
        # result is immediately overwritten by body1(z) -> dead code, omitted.
        del t
        xhat = decoder_forward_pallas(z, params)
        gauss = xhat[:, rd[0]:rd[-1] + 1]
        bin_noise = [xhat[:, v0:v1 + 1] for (v0, v1) in bins]
        cat_noise = [xhat[:, v0 + 1:v1 + 1] for (v0, v1) in cats]
        return gauss, tuple(bin_noise + cat_noise)

    return fwd


# --------------------------- param construction -----------------------------

def _linear_params(key, fan_in, fan_out):
    # PyTorch nn.Linear default init: U(-1/sqrt(fan_in), 1/sqrt(fan_in)).
    kw, kb = jax.random.split(key)
    bound = 1.0 / jnp.sqrt(jnp.float32(fan_in))
    w = jax.random.uniform(kw, (fan_in, fan_out), jnp.float32, -bound, bound)
    b = jax.random.uniform(kb, (1, fan_out), jnp.float32, -bound, bound)
    return w, b


def make_decoder_params(key, input_dim, output_dim, arch):
    k1, k2, k5 = jax.random.split(key, 3)
    a0_out = arch[0][0]
    a1_in, a1_out = arch[1]
    a4_in = arch[4][0]

    w1, b1 = _linear_params(k1, input_dim + 1, a0_out)
    w2, b2 = _linear_params(k2, a1_in, a1_out)
    w5, b5 = _linear_params(k5, a4_in, output_dim + 1)

    # nn.LayerNorm default init: weight=1, bias=0.
    g1 = jnp.ones((1, a0_out), jnp.float32)
    be1 = jnp.zeros((1, a0_out), jnp.float32)
    g2 = jnp.ones((1, a1_out), jnp.float32)
    be2 = jnp.zeros((1, a1_out), jnp.float32)

    return dict(w1=w1, b1=b1, g1=g1, be1=be1,
                w2=w2, b2=b2, g2=g2, be2=be2,
                w5=w5, b5=b5)


# -------------------------- pure-JAX reference ------------------------------

def decoder_forward_ref(z, params):
    def gelu(x):
        return 0.5 * x * (1.0 + lax.erf(x / jnp.sqrt(2.0)))

    def ln(x, g, b, eps=1e-5):
        m = jnp.mean(x, -1, keepdims=True)
        v = jnp.mean((x - m) ** 2, -1, keepdims=True)
        return (x - m) / jnp.sqrt(v + eps) * g + b

    h = gelu(ln(z @ params["w1"] + params["b1"], params["g1"], params["be1"]))
    h = gelu(ln(h @ params["w2"] + params["b2"], params["g2"], params["be2"]))
    return h @ params["w5"] + params["b5"]


# --------------------------------- main --------------------------------------

if __name__ == "__main__":
    # Synthetic config (mirrors config['generate']['backward_diffusion_decoder']):
    #   arch  = [[32,32],[32,32],[32,32],[32,32],[32,-]]
    #   bNorm = [32,32,0,0,0], relu = [1,1,1,1,0], dropout = [0]*5
    input_dim = 7      # z carries input_dim + 1 = 8 features (required by body1)
    output_dim = 11    # xhat has output_dim + 1 = 12 columns
    arch = [[32, 32], [32, 32], [32, 32], [32, 32], [32, 32]]

    key = jax.random.PRNGKey(0)
    kz, kp, kz2 = jax.random.split(key, 3)

    params = make_decoder_params(kp, input_dim, output_dim, arch)

    feature_type_dict = {
        "real_data": (0, 3),                 # -> xhat[:, 0:4]
        "binary_param": ((4, 5), (6, 7)),    # -> xhat[:, 4:6], xhat[:, 6:8]
        "categorical_one_hot": ((7, 11),),   # -> xhat[:, 8:12]
    }
    decoder_forward = make_decoder_forward(feature_type_dict)

    # ---- small batch (module-scale): gridless path -------------------------
    B = 8
    z = jax.random.normal(kz, (B, input_dim + 1), jnp.float32)
    gauss, cat_list = decoder_forward(z, 0.25, params)
    jax.block_until_ready(gauss)
    for c in cat_list:
        jax.block_until_ready(c)

    xhat_ref = decoder_forward_ref(z, params)
    xhat_small = decoder_forward_pallas(z, params)
    assert jnp.allclose(xhat_small, xhat_ref, atol=1e-4, rtol=1e-5), (
        float(jnp.max(jnp.abs(xhat_small - xhat_ref))))
    assert gauss.shape == (B, 4)
    assert [c.shape for c in cat_list] == [(B, 2), (B, 2), (B, 4)]
    assert jnp.allclose(gauss, xhat_ref[:, 0:4], atol=1e-4, rtol=1e-5)
    assert jnp.allclose(cat_list[0], xhat_ref[:, 4:6], atol=1e-4, rtol=1e-5)
    assert jnp.allclose(cat_list[2], xhat_ref[:, 8:12], atol=1e-4, rtol=1e-5)

    # ---- larger batch: batch-tiled "parallel" path --------------------------
    B2 = 2048
    z2 = jax.random.normal(kz2, (B2, input_dim + 1), jnp.float32)
    xhat_big = decoder_forward_pallas(z2, params, batch_tile=512)
    jax.block_until_ready(xhat_big)
    xhat_big_ref = decoder_forward_ref(z2, params)
    assert jnp.allclose(xhat_big, xhat_big_ref, atol=1e-4, rtol=1e-5), (
        float(jnp.max(jnp.abs(xhat_big - xhat_big_ref))))

    print("KERNEL_OK")
</pallas_src>

<mosaic_0001>
module attributes {stable_mosaic.version = 11 : i64} {
  func.func @decoder_kernel(%arg0: memref<8x8xf32, #tpu.memory_space<vmem>>, %arg1: memref<8x32xf32, #tpu.memory_space<vmem>>, %arg2: memref<1x32xf32, #tpu.memory_space<vmem>>, %arg3: memref<1x32xf32, #tpu.memory_space<vmem>>, %arg4: memref<1x32xf32, #tpu.memory_space<vmem>>, %arg5: memref<32x32xf32, #tpu.memory_space<vmem>>, %arg6: memref<1x32xf32, #tpu.memory_space<vmem>>, %arg7: memref<1x32xf32, #tpu.memory_space<vmem>>, %arg8: memref<1x32xf32, #tpu.memory_space<vmem>>, %arg9: memref<32x12xf32, #tpu.memory_space<vmem>>, %arg10: memref<1x12xf32, #tpu.memory_space<vmem>>, %arg11: memref<8x12xf32, #tpu.memory_space<vmem>>) attributes {dimension_semantics = [], scalar_prefetch = 0 : i64, scratch_operands = 0 : i64, tpu.core_type = #tpu.core_type<tc>} {
    %c0 = arith.constant 0 : index
    %c0_0 = arith.constant 0 : index
    %0 = vector.load %arg0[%c0, %c0_0] : memref<8x8xf32, #tpu.memory_space<vmem>>, vector<8x8xf32>
    %c0_1 = arith.constant 0 : index
    %c0_2 = arith.constant 0 : index
    %1 = vector.load %arg1[%c0_1, %c0_2] : memref<8x32xf32, #tpu.memory_space<vmem>>, vector<8x32xf32>
    %cst = arith.constant dense<0.000000e+00> : vector<8x32xf32>
    %2 = tpu.matmul %0, %1, %cst {dimension_numbers = #tpu.dot_dimension_numbers<[1], [0], [0], [1], [0, 0, 1, 1], [], []>} : vector<8x8xf32>, vector<8x32xf32>, vector<8x32xf32> -> vector<8x32xf32>
    %c0_3 = arith.constant 0 : index
    %c0_4 = arith.constant 0 : index
    %3 = vector.load %arg2[%c0_3, %c0_4] : memref<1x32xf32, #tpu.memory_space<vmem>>, vector<1x32xf32>
    %4 = vector.broadcast %3 : vector<1x32xf32> to vector<8x32xf32>
    %5 = arith.addf %2, %4 : vector<8x32xf32>
    %c0_5 = arith.constant 0 : index
    %c0_6 = arith.constant 0 : index
    %6 = vector.load %arg3[%c0_5, %c0_6] : memref<1x32xf32, #tpu.memory_space<vmem>>, vector<1x32xf32>
    %c0_7 = arith.constant 0 : index
    %c0_8 = arith.constant 0 : index
    %7 = vector.load %arg4[%c0_7, %c0_8] : memref<1x32xf32, #tpu.memory_space<vmem>>, vector<1x32xf32>
    %cst_9 = arith.constant dense<0.000000e+00> : vector<8xf32>
    %8 = vector.multi_reduction <add>, %5, %cst_9 [1] : vector<8x32xf32> to vector<8xf32>
    %9 = vector.shape_cast %8 : vector<8xf32> to vector<8x1xf32>
    %cst_10 = arith.constant 3.200000e+01 : f32
    %10 = vector.broadcast %cst_10 : f32 to vector<8x1xf32>
    %11 = arith.divf %9, %10 : vector<8x1xf32>
    %12 = vector.broadcast %11 : vector<8x1xf32> to vector<8x32xf32>
    %13 = arith.subf %5, %12 : vector<8x32xf32>
    %14 = arith.mulf %13, %13 : vector<8x32xf32>
    %cst_11 = arith.constant dense<0.000000e+00> : vector<8xf32>
    %15 = vector.multi_reduction <add>, %14, %cst_11 [1] : vector<8x32xf32> to vector<8xf32>
    %16 = vector.shape_cast %15 : vector<8xf32> to vector<8x1xf32>
    %cst_12 = arith.constant 3.200000e+01 : f32
    %17 = vector.broadcast %cst_12 : f32 to vector<8x1xf32>
    %18 = arith.divf %16, %17 : vector<8x1xf32>
    %cst_13 = arith.constant 9.99999974E-6 : f32
    %19 = vector.broadcast %cst_13 : f32 to vector<8x1xf32>
    %20 = arith.addf %18, %19 : vector<8x1xf32>
    %21 = math.rsqrt %20 : vector<8x1xf32>
    %22 = vector.broadcast %6 : vector<1x32xf32> to vector<8x32xf32>
    %23 = vector.broadcast %21 : vector<8x1xf32> to vector<8x32xf32>
    %24 = arith.mulf %22, %23 : vector<8x32xf32>
    %25 = arith.mulf %5, %24 : vector<8x32xf32>
    %26 = vector.broadcast %11 : vector<8x1xf32> to vector<8x32xf32>
    %27 = arith.mulf %26, %24 : vector<8x32xf32>
    %28 = vector.broadcast %7 : vector<1x32xf32> to vector<8x32xf32>
    %29 = arith.subf %28, %27 : vector<8x32xf32>
    %30 = arith.addf %25, %29 : vector<8x32xf32>
    %cst_14 = arith.constant 5.000000e-01 : f32
    %31 = vector.broadcast %cst_14 : f32 to vector<8x32xf32>
    %32 = arith.mulf %31, %30 : vector<8x32xf32>
    %cst_15 = arith.constant 0.707106769 : f32
    %33 = vector.broadcast %cst_15 : f32 to vector<8x32xf32>
    %34 = arith.mulf %30, %33 : vector<8x32xf32>
    %35 = math.erf %34 : vector<8x32xf32>
    %cst_16 = arith.constant 1.000000e+00 : f32
    %36 = vector.broadcast %cst_16 : f32 to vector<8x32xf32>
    %37 = arith.addf %36, %35 : vector<8x32xf32>
    %38 = arith.mulf %32, %37 : vector<8x32xf32>
    %c0_17 = arith.constant 0 : index
    %c0_18 = arith.constant 0 : index
    %39 = vector.load %arg5[%c0_17, %c0_18] : memref<32x32xf32, #tpu.memory_space<vmem>>, vector<32x32xf32>
    %cst_19 = arith.constant dense<0.000000e+00> : vector<8x32xf32>
    %40 = tpu.matmul %38, %39, %cst_19 {dimension_numbers = #tpu.dot_dimension_numbers<[1], [0], [0], [1], [0, 0, 1, 1], [], []>} : vector<8x32xf32>, vector<32x32xf32>, vector<8x32xf32> -> vector<8x32xf32>
    %c0_20 = arith.constant 0 : index
    %c0_21 = arith.constant 0 : index
    %41 = vector.load %arg6[%c0_20, %c0_21] : memref<1x32xf32, #tpu.memory_space<vmem>>, vector<1x32xf32>
    %42 = vector.broadcast %41 : vector<1x32xf32> to vector<8x32xf32>
    %43 = arith.addf %40, %42 : vector<8x32xf32>
    %c0_22 = arith.constant 0 : index
    %c0_23 = arith.constant 0 : index
    %44 = vector.load %arg7[%c0_22, %c0_23] : memref<1x32xf32, #tpu.memory_space<vmem>>, vector<1x32xf32>
    %c0_24 = arith.constant 0 : index
    %c0_25 = arith.constant 0 : index
    %45 = vector.load %arg8[%c0_24, %c0_25] : memref<1x32xf32, #tpu.memory_space<vmem>>, vector<1x32xf32>
    %cst_26 = arith.constant dense<0.000000e+00> : vector<8xf32>
    %46 = vector.multi_reduction <add>, %43, %cst_26 [1] : vector<8x32xf32> to vector<8xf32>
    %47 = vector.shape_cast %46 : vector<8xf32> to vector<8x1xf32>
    %cst_27 = arith.constant 3.200000e+01 : f32
    %48 = vector.broadcast %cst_27 : f32 to vector<8x1xf32>
    %49 = arith.divf %47, %48 : vector<8x1xf32>
    %50 = vector.broadcast %49 : vector<8x1xf32> to vector<8x32xf32>
    %51 = arith.subf %43, %50 : vector<8x32xf32>
    %52 = arith.mulf %51, %51 : vector<8x32xf32>
    %cst_28 = arith.constant dense<0.000000e+00> : vector<8xf32>
    %53 = vector.multi_reduction <add>, %52, %cst_28 [1] : vector<8x32xf32> to vector<8xf32>
    %54 = vector.shape_cast %53 : vector<8xf32> to vector<8x1xf32>
    %cst_29 = arith.constant 3.200000e+01 : f32
    %55 = vector.broadcast %cst_29 : f32 to vector<8x1xf32>
    %56 = arith.divf %54, %55 : vector<8x1xf32>
    %cst_30 = arith.constant 9.99999974E-6 : f32
    %57 = vector.broadcast %cst_30 : f32 to vector<8x1xf32>
    %58 = arith.addf %56, %57 : vector<8x1xf32>
    %59 = math.rsqrt %58 : vector<8x1xf32>
    %60 = vector.broadcast %44 : vector<1x32xf32> to vector<8x32xf32>
    %61 = vector.broadcast %59 : vector<8x1xf32> to vector<8x32xf32>
    %62 = arith.mulf %60, %61 : vector<8x32xf32>
    %63 = arith.mulf %43, %62 : vector<8x32xf32>
    %64 = vector.broadcast %49 : vector<8x1xf32> to vector<8x32xf32>
    %65 = arith.mulf %64, %62 : vector<8x32xf32>
    %66 = vector.broadcast %45 : vector<1x32xf32> to vector<8x32xf32>
    %67 = arith.subf %66, %65 : vector<8x32xf32>
    %68 = arith.addf %63, %67 : vector<8x32xf32>
    %cst_31 = arith.constant 5.000000e-01 : f32
    %69 = vector.broadcast %cst_31 : f32 to vector<8x32xf32>
    %70 = arith.mulf %69, %68 : vector<8x32xf32>
    %cst_32 = arith.constant 0.707106769 : f32
    %71 = vector.broadcast %cst_32 : f32 to vector<8x32xf32>
    %72 = arith.mulf %68, %71 : vector<8x32xf32>
    %73 = math.erf %72 : vector<8x32xf32>
    %cst_33 = arith.constant 1.000000e+00 : f32
    %74 = vector.broadcast %cst_33 : f32 to vector<8x32xf32>
    %75 = arith.addf %74, %73 : vector<8x32xf32>
    %76 = arith.mulf %70, %75 : vector<8x32xf32>
    %c0_34 = arith.constant 0 : index
    %c0_35 = arith.constant 0 : index
    %77 = vector.load %arg9[%c0_34, %c0_35] : memref<32x12xf32, #tpu.memory_space<vmem>>, vector<32x12xf32>
    %cst_36 = arith.constant dense<0.000000e+00> : vector<8x12xf32>
    %78 = tpu.matmul %76, %77, %cst_36 {dimension_numbers = #tpu.dot_dimension_numbers<[1], [0], [0], [1], [0, 0, 1, 1], [], []>} : vector<8x32xf32>, vector<32x12xf32>, vector<8x12xf32> -> vector<8x12xf32>
    %c0_37 = arith.constant 0 : index
    %c0_38 = arith.constant 0 : index
    %79 = vector.load %arg10[%c0_37, %c0_38] : memref<1x12xf32, #tpu.memory_space<vmem>>, vector<1x12xf32>
    %80 = vector.broadcast %79 : vector<1x12xf32> to vector<8x12xf32>
    %81 = arith.addf %78, %80 : vector<8x12xf32>
    %c0_39 = arith.constant 0 : index
    %c0_40 = arith.constant 0 : index
    %82 = vector.load %arg11[%c0_39, %c0_40] : memref<8x12xf32, #tpu.memory_space<vmem>>, vector<8x12xf32>
    tpu.vector_store %arg11[%c0_39, %c0_40], %81 {strides = array<i32>} : memref<8x12xf32, #tpu.memory_space<vmem>>, vector<8x12xf32>,
    return
  }
}

</mosaic_0001>

<llo_original>
// kernel: fwd.1
$region0: #{fwd.1}
  #allocation0 [shape = 'u32[]', space=smem, size = 0x4, offset = 0x4, fixed_abs, tag = 'smem constant byte address 0x4 - core index']
  #allocation1 [shape = 'u32[144,128]{1,0:T(1,128)}', space=vmem, size = 0x12000, scoped, tag = 'internal scratch']
  %s0 = inlined_call_operand.vmem [shape: f32[8,8], index: 0, kind: input, shape index: {}]
  %s1 = inlined_call_operand.vmem [shape: f32[8,32], index: 1, kind: input, shape index: {}]
  %s2 = inlined_call_operand.vmem [shape: f32[1,32], index: 2, kind: input, shape index: {}]
  %s3 = inlined_call_operand.vmem [shape: f32[1,32], index: 3, kind: input, shape index: {}]
  %s4 = inlined_call_operand.hbm [shape: f32[1,32], index: 4, kind: input, shape index: {}]
  %s5 = inlined_call_operand.vmem [shape: f32[32,32], index: 5, kind: input, shape index: {}]
  %s6 = inlined_call_operand.hbm [shape: f32[1,32], index: 6, kind: input, shape index: {}]
  %s7 = inlined_call_operand.hbm [shape: f32[1,32], index: 7, kind: input, shape index: {}]
  %s8 = inlined_call_operand.hbm [shape: f32[1,32], index: 8, kind: input, shape index: {}]
  %s9 = inlined_call_operand.vmem [shape: f32[32,12], index: 9, kind: input, shape index: {}]
  %s10 = inlined_call_operand.hbm [shape: f32[1,12], index: 10, kind: input, shape index: {}]
  %s11 = inlined_call_operand.vmem [shape: f32[8,12], index: 11, kind: output, shape index: {}]
  %s12 = sld [smem:[#allocation0]]
  $region74: #{fwd.1} parent=0
    _
  %s14 = ssub.s32 1, %s12
  %s15 = scalar_select 0, %s14, %s12
  $region1: #{fwd.1} parent=0
    #allocation2 [shape = 'u8[512]{0}', space=vmem, size = 0x400, scoped, tag = 'input window, operand 4, single buffered']
    #allocation3 [shape = 's32[1]{0}', space=sflag, size = 0x4, scoped, tag = 'scoped memory for fwd.1']
    #allocation4 [shape = 'u8[512]{0}', space=vmem, size = 0x400, scoped, tag = 'input window, operand 6, single buffered']
    #allocation5 [shape = 's32[1]{0}', space=sflag, size = 0x4, scoped, tag = 'scoped memory for fwd.1']
    #allocation6 [shape = 'u8[512]{0}', space=vmem, size = 0x400, scoped, tag = 'input window, operand 7, single buffered']
    #allocation7 [shape = 'u8[512]{0}', space=vmem, size = 0x400, scoped, tag = 'input window, operand 8, single buffered']
    #allocation8 [shape = 's32[1]{0}', space=sflag, size = 0x4, scoped, tag = 'scoped memory for fwd.1']
    #allocation9 [shape = 'u8[512]{0}', space=vmem, size = 0x400, scoped, tag = 'input window, operand 10, single buffered']
    %16 = vsyncpa [#allocation3], 0
    %17 = vsyncpa [#allocation5], 0
    %18 = vsyncpa [#allocation8], 0
    // Predicated region
    $region2: #{fwd.1} parent=1 // pred_check
      _
    $region3: #{fwd.1} parent=1 // pred_check_branch
      %20 = sbr.rel (0) target = $region5
    $region4: #{fwd.1} parent=1 // pred_region
      _
    $region5: #{fwd.1} parent=1 // pred_fallthru
      _
    // Predicated region
    $region6: #{fwd.1} parent=1 // pred_check
      _
    $region7: #{fwd.1} parent=1 // pred_check_branch
      %22 = sbr.rel (0) target = $region9
    $region8: #{fwd.1} parent=1 // pred_region
      _
    $region9: #{fwd.1} parent=1 // pred_fallthru
      _
    // Predicated region
    $region10: #{fwd.1} parent=1 // pred_check
      _
    $region11: #{fwd.1} parent=1 // pred_check_branch
      %24 = sbr.rel (0) target = $region13
    $region12: #{fwd.1} parent=1 // pred_region
      _
    $region13: #{fwd.1} parent=1 // pred_fallthru
      _
    // Predicated region
    $region14: #{fwd.1} parent=1 // pred_check
      _
    $region15: #{fwd.1} parent=1 // pred_check_branch
      %26 = sbr.rel (0) target = $region17
    $region16: #{fwd.1} parent=1 // pred_region
      _
    $region17: #{fwd.1} parent=1 // pred_fallthru
      _
    // Predicated region
    $region18: #{fwd.1} parent=1 // pred_check
      _
    $region19: #{fwd.1} parent=1 // pred_check_branch
      %28 = sbr.rel (0) target = $region21
    $region20: #{fwd.1} parent=1 // pred_region
      %s30 = ssub.s32 16, 16
      %31 = vsyncadd [#allocation3], %s30
      %s33 = sshll.u32 [#allocation2], 4
      %s34 = int_to_ptr.vmem [resolvable:$true] %s33
      %36 = dma.hbm_to_vmem [thread:$0]  %s4, 16, %s34, [#allocation3]
    $region21: #{fwd.1} parent=1 // pred_fallthru
      _
    // Predicated region
    $region22: #{fwd.1} parent=1 // pred_check
      _
    $region23: #{fwd.1} parent=1 // pred_check_branch
      %38 = sbr.rel (0) target = $region25
    $region24: #{fwd.1} parent=1 // pred_region
      _
    $region25: #{fwd.1} parent=1 // pred_fallthru
      _
    // Predicated region
    $region26: #{fwd.1} parent=1 // pred_check
      _
    $region27: #{fwd.1} parent=1 // pred_check_branch
      %40 = sbr.rel (0) target = $region29
    $region28: #{fwd.1} parent=1 // pred_region
      %s42 = ssub.s32 16, 16
      %43 = vsyncadd [#allocation5], %s42
      %s45 = sshll.u32 [#allocation4], 4
      %s46 = int_to_ptr.vmem [resolvable:$true] %s45
      %48 = dma.hbm_to_vmem [thread:$0]  %s6, 16, %s46, [#allocation5]
    $region29: #{fwd.1} parent=1 // pred_fallthru
      _
    // Predicated region
    $region30: #{fwd.1} parent=1 // pred_check
      _
    $region31: #{fwd.1} parent=1 // pred_check_branch
      %50 = sbr.rel (0) target = $region33
    $region32: #{fwd.1} parent=1 // pred_region
      %s52 = ssub.s32 16, 16
      %53 = vsyncadd [#allocation5], %s52
      %s55 = sshll.u32 [#allocation6], 4
      %s56 = int_to_ptr.vmem [resolvable:$true] %s55
      %58 = dma.hbm_to_vmem [thread:$0]  %s7, 16, %s56, [#allocation5]
    $region33: #{fwd.1} parent=1 // pred_fallthru
      _
    // Predicated region
    $region34: #{fwd.1} parent=1 // pred_check
      _
    $region35: #{fwd.1} parent=1 // pred_check_branch
      %60 = sbr.rel (0) target = $region37
    $region36: #{fwd.1} parent=1 // pred_region
      %s62 = ssub.s32 16, 16
      %63 = vsyncadd [#allocation8], %s62
      %s65 = sshll.u32 [#allocation7], 4
      %s66 = int_to_ptr.vmem [resolvable:$true] %s65
      %68 = dma.hbm_to_vmem [thread:$0]  %s8, 16, %s66, [#allocation8]
    $region37: #{fwd.1} parent=1 // pred_fallthru
      _
    // Predicated region
    $region38: #{fwd.1} parent=1 // pred_check
      _
    $region39: #{fwd.1} parent=1 // pred_check_branch
      %70 = sbr.rel (0) target = $region41
    $region40: #{fwd.1} parent=1 // pred_region
      _
    $region41: #{fwd.1} parent=1 // pred_fallthru
      _
    // Predicated region
    $region42: #{fwd.1} parent=1 // pred_check
      _
    $region43: #{fwd.1} parent=1 // pred_check_branch
      %72 = sbr.rel (0) target = $region45
    $region44: #{fwd.1} parent=1 // pred_region
      %s74 = ssub.s32 16, 16
      %75 = vsyncadd [#allocation8], %s74
      %s77 = sshll.u32 [#allocation9], 4
      %s78 = int_to_ptr.vmem [resolvable:$true] %s77
      %80 = dma.hbm_to_vmem [thread:$0]  %s10, 16, %s78, [#allocation8]
    $region45: #{fwd.1} parent=1 // pred_fallthru
      _
    // Predicated region
    $region46: #{fwd.1} parent=1 // pred_check
      _
    $region47: #{fwd.1} parent=1 // pred_check_branch
      %82 = sbr.rel (0) target = $region49
    $region48: #{fwd.1} parent=1 // pred_region
      %83 = dma.done [#allocation3], 16
    $region49: #{fwd.1} parent=1 // pred_fallthru
      _
    // Predicated region
    $region50: #{fwd.1} parent=1 // pred_check
      _
    $region51: #{fwd.1} parent=1 // pred_check_branch
      %85 = sbr.rel (0) target = $region53
    $region52: #{fwd.1} parent=1 // pred_region
      %86 = dma.done [#allocation5], 16
    $region53: #{fwd.1} parent=1 // pred_fallthru
      _
    // Predicated region
    $region54: #{fwd.1} parent=1 // pred_check
      _
    $region55: #{fwd.1} parent=1 // pred_check_branch
      %88 = sbr.rel (0) target = $region57
    $region56: #{fwd.1} parent=1 // pred_region
      %89 = dma.done [#allocation5], 16
    $region57: #{fwd.1} parent=1 // pred_fallthru
      _
    // Predicated region
    $region58: #{fwd.1} parent=1 // pred_check
      _
    $region59: #{fwd.1} parent=1 // pred_check_branch
      %91 = sbr.rel (0) target = $region61
    $region60: #{fwd.1} parent=1 // pred_region
      %92 = dma.done [#allocation8], 16
    $region61: #{fwd.1} parent=1 // pred_fallthru
      _
    // Predicated region
    $region62: #{fwd.1} parent=1 // pred_check
      _
    $region63: #{fwd.1} parent=1 // pred_check_branch
      %94 = sbr.rel (0) target = $region65
    $region64: #{fwd.1} parent=1 // pred_region
      %95 = dma.done [#allocation8], 16
    $region65: #{fwd.1} parent=1 // pred_fallthru
      _
    %v96 = vld [vmem:[%s0] sm:$0xff]
    %v97 = vld [vmem:[%s1] sm:$0xff]
    %v98 = vld [vmem:[%s2] sm:$0x1]
    %v100 = vlaneseq
    %v101 = vshrl.u32 %v100, 7
    %v102 = vsub.s32 0, %v101
    %v103 = vrot.slane %v98, %v102
    %vm105 = vcmask 64512
    %v107 = vsel %vm105, %v96, 0
    %109 = vmatprep.subr.mxu0 0.0
    %110 = vmatpush1.msra.mxu0 0.0
    %111 = vmatprep.subr.mxu0 0.0
    %112 = vmatpush1.msra.mxu0 0.0
    %113 = vmatprep.subr.mxu0 0.0
    %114 = vmatpush1.msra.mxu0 0.0
    %115 = vmatprep.subr.mxu0 0.0
    %116 = vmatpush1.msra.mxu0 0.0
    %117 = vmatprep.subr.mxu0 0.0
    %118 = vmatpush1.msra.mxu0 0.0
    %119 = vmatprep.subr.mxu0 0.0
    %120 = vmatpush1.msra.mxu0 0.0
    %121 = vmatprep.subr.mxu0 0.0
    %122 = vmatpush1.msra.mxu0 0.0
    %123 = vmatprep.subr.mxu0 0.0
    %124 = vmatpush1.msra.mxu0 0.0
    %125 = vmatprep.subr.mxu0 0.0
    %126 = vmatpush1.msra.mxu0 0.0
    %127 = vmatprep.subr.mxu0 0.0
    %128 = vmatpush1.msra.mxu0 0.0
    %129 = vmatprep.subr.mxu0 0.0
    %130 = vmatpush1.msra.mxu0 0.0
    %131 = vmatprep.subr.mxu0 0.0
    %132 = vmatpush1.msra.mxu0 0.0
    %133 = vmatprep.subr.mxu0 0.0
    %134 = vmatpush1.msra.mxu0 0.0
    %135 = vmatprep.subr.mxu0 0.0
    %136 = vmatpush1.msra.mxu0 0.0
    %137 = vmatprep.subr.mxu0 0.0
    %138 = vmatpush1.msra.mxu0 0.0
    %139 = vmatprep.subr.mxu0 0.0
    %140 = vmatpush1.msra.mxu0 %v97
    %141 = vmatprep.subr.mxu0 0.0
    %142 = vmatpush2.msra.mxu0 0.0
    %143 = vmatprep.subr.mxu0 0.0
    %144 = vmatpush2.msra.mxu0 0.0
    %145 = vmatprep.subr.mxu0 0.0
    %146 = vmatpush2.msra.mxu0 0.0
    %147 = vmatprep.subr.mxu0 0.0
    %148 = vmatpush2.msra.mxu0 0.0
    %149 = vmatprep.subr.mxu0 0.0
    %150 = vmatpush2.msra.mxu0 0.0
    %151 = vmatprep.subr.mxu0 0.0
    %152 = vmatpush2.msra.mxu0 0.0
    %153 = vmatprep.subr.mxu0 0.0
    %154 = vmatpush2.msra.mxu0 0.0
    %155 = vmatprep.subr.mxu0 0.0
    %156 = vmatpush2.msra.mxu0 0.0
    %157 = vmatprep.subr.mxu0 0.0
    %158 = vmatpush2.msra.mxu0 0.0
    %159 = vmatprep.subr.mxu0 0.0
    %160 = vmatpush2.msra.mxu0 0.0
    %161 = vmatprep.subr.mxu0 0.0
    %162 = vmatpush2.msra.mxu0 0.0
    %163 = vmatprep.subr.mxu0 0.0
    %164 = vmatpush2.msra.mxu0 0.0
    %165 = vmatprep.subr.mxu0 0.0
    %166 = vmatpush2.msra.mxu0 0.0
    %167 = vmatprep.subr.mxu0 0.0
    %168 = vmatpush2.msra.mxu0 0.0
    %169 = vmatprep.subr.mxu0 0.0
    %170 = vmatpush2.msra.mxu0 0.0
    %171 = vmatprep.subr.mxu0 0.0
    %172 = vmatpush2.msra.mxu0 0.0
    %173 = vmatprep.mubr.f32.mxu0 0.0
    %174 = vmatmul.mubr.f32.gmra.mxu0 %v107
    %v175 = vpop.f32.mrf.mxu0
    %v176 = vadd.f32 %v103, %v175
    %v177 = vpop.f32.mrf.mxu0
    %178 = vdwg.mxu0
    %v179 = vld [vmem:[%s3] sm:$0x1]
    %v180 = vld [vmem:[#allocation2] sm:$0x1]
    %vm181 = vcmask 261120
    %v182 = vsel %vm181, %v176, 0.0
    %183 = vadd.xlane.f32.xlu0 %v182
    %v184 = vpop.xlane.xlu0 %183
    %v185 = vrcp.pop 32.0
    %v186 = vmul.f32 %v184, %v185
    %v187 = vsub.f32 %v176, %v186
    %v188 = vmul.f32 %v187, %v187
    %v189 = vsel %vm181, %v188, 0.0
    %190 = vadd.xlane.f32.xlu0 %v189
    %v191 = vpop.xlane.xlu0 %190
    %v192 = vmul.f32 %v191, %v185
    %v193 = vadd.f32 %v192, 1e-05
    %v194 = vrsqrt.pop %v193
    %v196 = vlaneseq
    %v197 = vshrl.u32 %v196, 7
    %v198 = vsub.s32 0, %v197
    %v199 = vrot.slane %v179, %v198
    %v201 = vmul.f32 %v199, %v194
    %v202 = vmul.f32 %v176, %v201
    %v203 = vmul.f32 %v186, %v201
    %v205 = vlaneseq
    %v206 = vshrl.u32 %v205, 7
    %v207 = vsub.s32 0, %v206
    %v208 = vrot.slane %v180, %v207
    %v210 = vsub.f32 %v208, %v203
    %v211 = vadd.f32 %v202, %v210
    %v212 = vmul.f32 %v211, 0.5
    %v213 = vmul.f32 %v211, 0.70710677
    %v214 = verf.f32.pop %v213
    %v215 = vadd.f32 %v214, 1.0
    %v216 = vmul.f32 %v212, %v215
    %v217 = vld [vmem:[%s5] sm:$0xff]
    %v218 = vld [vmem:[%s5 + $0x8] sm:$0xff]
    %v219 = vld [vmem:[%s5 + $0x10] sm:$0xff]
    %v220 = vld [vmem:[%s5 + $0x18] sm:$0xff]
    %v221 = vld [vmem:[#allocation4] sm:$0x1]
    %v223 = vlaneseq
    %v224 = vshrl.u32 %v223, 7
    %v225 = vsub.s32 0, %v224
    %v226 = vrot.slane %v221, %v225
    %v229 = vsel %vm181, %v216, 0
    %231 = vmatprep.subr.mxu0 0.0
    %232 = vmatpush1.msra.mxu0 0.0
    %233 = vmatprep.subr.mxu0 0.0
    %234 = vmatpush1.msra.mxu0 0.0
    %235 = vmatprep.subr.mxu0 0.0
    %236 = vmatpush1.msra.mxu0 0.0
    %237 = vmatprep.subr.mxu0 0.0
    %238 = vmatpush1.msra.mxu0 0.0
    %239 = vmatprep.subr.mxu0 0.0
    %240 = vmatpush1.msra.mxu0 0.0
    %241 = vmatprep.subr.mxu0 0.0
    %242 = vmatpush1.msra.mxu0 0.0
    %243 = vmatprep.subr.mxu0 0.0
    %244 = vmatpush1.msra.mxu0 0.0
    %245 = vmatprep.subr.mxu0 0.0
    %246 = vmatpush1.msra.mxu0 0.0
    %247 = vmatprep.subr.mxu0 0.0
    %248 = vmatpush1.msra.mxu0 0.0
    %249 = vmatprep.subr.mxu0 0.0
    %250 = vmatpush1.msra.mxu0 0.0
    %251 = vmatprep.subr.mxu0 0.0
    %252 = vmatpush1.msra.mxu0 0.0
    %253 = vmatprep.subr.mxu0 0.0
    %254 = vmatpush1.msra.mxu0 0.0
    %255 = vmatprep.subr.mxu0 0.0
    %256 = vmatpush1.msra.mxu0 %v220
    %257 = vmatprep.subr.mxu0 0.0
    %258 = vmatpush1.msra.mxu0 %v219
    %259 = vmatprep.subr.mxu0 0.0
    %260 = vmatpush1.msra.mxu0 %v218
    %261 = vmatprep.subr.mxu0 0.0
    %262 = vmatpush1.msra.mxu0 %v217
    %263 = vmatprep.subr.mxu0 0.0
    %264 = vmatpush2.msra.mxu0 0.0
    %265 = vmatprep.subr.mxu0 0.0
    %266 = vmatpush2.msra.mxu0 0.0
    %267 = vmatprep.subr.mxu0 0.0
    %268 = vmatpush2.msra.mxu0 0.0
    %269 = vmatprep.subr.mxu0 0.0
    %270 = vmatpush2.msra.mxu0 0.0
    %271 = vmatprep.subr.mxu0 0.0
    %272 = vmatpush2.msra.mxu0 0.0
    %273 = vmatprep.subr.mxu0 0.0
    %274 = vmatpush2.msra.mxu0 0.0
    %275 = vmatprep.subr.mxu0 0.0
    %276 = vmatpush2.msra.mxu0 0.0
    %277 = vmatprep.subr.mxu0 0.0
    %278 = vmatpush2.msra.mxu0 0.0
    %279 = vmatprep.subr.mxu0 0.0
    %280 = vmatpush2.msra.mxu0 0.0
    %281 = vmatprep.subr.mxu0 0.0
    %282 = vmatpush2.msra.mxu0 0.0
    %283 = vmatprep.subr.mxu0 0.0
    %284 = vmatpush2.msra.mxu0 0.0
    %285 = vmatprep.subr.mxu0 0.0
    %286 = vmatpush2.msra.mxu0 0.0
    %287 = vmatprep.subr.mxu0 0.0
    %288 = vmatpush2.msra.mxu0 0.0
    %289 = vmatprep.subr.mxu0 0.0
    %290 = vmatpush2.msra.mxu0 0.0
    %291 = vmatprep.subr.mxu0 0.0
    %292 = vmatpush2.msra.mxu0 0.0
    %293 = vmatprep.subr.mxu0 0.0
    %294 = vmatpush2.msra.mxu0 0.0
    %295 = vmatprep.mubr.f32.mxu0 0.0
    %296 = vmatmul.mubr.f32.gmra.mxu0 %v229
    %v297 = vpop.f32.mrf.mxu0
    %v298 = vadd.f32 %v226, %v297
    %v299 = vpop.f32.mrf.mxu0
    %300 = vdwg.mxu0
    %v301 = vld [vmem:[#allocation6] sm:$0x1]
    %v302 = vld [vmem:[#allocation7] sm:$0x1]
    %v303 = vsel %vm181, %v298, 0.0
    %304 = vadd.xlane.f32.xlu0 %v303
    %v305 = vpop.xlane.xlu0 %304
    %v306 = vmul.f32 %v305, %v185
    %v307 = vsub.f32 %v298, %v306
    %v308 = vmul.f32 %v307, %v307
    %v309 = vsel %vm181, %v308, 0.0
    %310 = vadd.xlane.f32.xlu0 %v309
    %v311 = vpop.xlane.xlu0 %310
    %v312 = vmul.f32 %v311, %v185
    %v313 = vadd.f32 %v312, 1e-05
    %v314 = vrsqrt.pop %v313
    %v316 = vlaneseq
    %v317 = vshrl.u32 %v316, 7
    %v318 = vsub.s32 0, %v317
    %v319 = vrot.slane %v301, %v318
    %v321 = vmul.f32 %v319, %v314
    %v322 = vmul.f32 %v298, %v321
    %v323 = vmul.f32 %v306, %v321
    %v325 = vlaneseq
    %v326 = vshrl.u32 %v325, 7
    %v327 = vsub.s32 0, %v326
    %v328 = vrot.slane %v302, %v327
    %v330 = vsub.f32 %v328, %v323
    %v331 = vadd.f32 %v322, %v330
    %v332 = vmul.f32 %v331, 0.5
    %v333 = vmul.f32 %v331, 0.70710677
    %v334 = verf.f32.pop %v333
    %v335 = vadd.f32 %v334, 1.0
    %v336 = vmul.f32 %v332, %v335
    %v337 = vld [vmem:[%s9] sm:$0xff]
    %v338 = vld [vmem:[%s9 + $0x8] sm:$0xff]
    %v339 = vld [vmem:[%s9 + $0x10] sm:$0xff]
    %v340 = vld [vmem:[%s9 + $0x18] sm:$0xff]
    %v341 = vld [vmem:[#allocation9] sm:$0x1]
    %v343 = vlaneseq
    %v344 = vshrl.u32 %v343, 7
    %v345 = vsub.s32 0, %v344
    %v346 = vrot.slane %v341, %v345
    %v349 = vsel %vm181, %v336, 0
    %351 = vmatprep.subr.mxu0 0.0
    %352 = vmatpush1.msra.mxu0 0.0
    %353 = vmatprep.subr.mxu0 0.0
    %354 = vmatpush1.msra.mxu0 0.0
    %355 = vmatprep.subr.mxu0 0.0
    %356 = vmatpush1.msra.mxu0 0.0
    %357 = vmatprep.subr.mxu0 0.0
    %358 = vmatpush1.msra.mxu0 0.0
    %359 = vmatprep.subr.mxu0 0.0
    %360 = vmatpush1.msra.mxu0 0.0
    %361 = vmatprep.subr.mxu0 0.0
    %362 = vmatpush1.msra.mxu0 0.0
    %363 = vmatprep.subr.mxu0 0.0
    %364 = vmatpush1.msra.mxu0 0.0
    %365 = vmatprep.subr.mxu0 0.0
    %366 = vmatpush1.msra.mxu0 0.0
    %367 = vmatprep.subr.mxu0 0.0
    %368 = vmatpush1.msra.mxu0 0.0
    %369 = vmatprep.subr.mxu0 0.0
    %370 = vmatpush1.msra.mxu0 0.0
    %371 = vmatprep.subr.mxu0 0.0
    %372 = vmatpush1.msra.mxu0 0.0
    %373 = vmatprep.subr.mxu0 0.0
    %374 = vmatpush1.msra.mxu0 0.0
    %375 = vmatprep.subr.mxu0 0.0
    %376 = vmatpush1.msra.mxu0 %v340
    %377 = vmatprep.subr.mxu0 0.0
    %378 = vmatpush1.msra.mxu0 %v339
    %379 = vmatprep.subr.mxu0 0.0
    %380 = vmatpush1.msra.mxu0 %v338
    %381 = vmatprep.subr.mxu0 0.0
    %382 = vmatpush1.msra.mxu0 %v337
    %383 = vmatprep.subr.mxu0 0.0
    %384 = vmatpush2.msra.mxu0 0.0
    %385 = vmatprep.subr.mxu0 0.0
    %386 = vmatpush2.msra.mxu0 0.0
    %387 = vmatprep.subr.mxu0 0.0
    %388 = vmatpush2.msra.mxu0 0.0
    %389 = vmatprep.subr.mxu0 0.0
    %390 = vmatpush2.msra.mxu0 0.0
    %391 = vmatprep.subr.mxu0 0.0
    %392 = vmatpush2.msra.mxu0 0.0
    %393 = vmatprep.subr.mxu0 0.0
    %394 = vmatpush2.msra.mxu0 0.0
    %395 = vmatprep.subr.mxu0 0.0
    %396 = vmatpush2.msra.mxu0 0.0
    %397 = vmatprep.subr.mxu0 0.0
    %398 = vmatpush2.msra.mxu0 0.0
    %399 = vmatprep.subr.mxu0 0.0
    %400 = vmatpush2.msra.mxu0 0.0
    %401 = vmatprep.subr.mxu0 0.0
    %402 = vmatpush2.msra.mxu0 0.0
    %403 = vmatprep.subr.mxu0 0.0
    %404 = vmatpush2.msra.mxu0 0.0
    %405 = vmatprep.subr.mxu0 0.0
    %406 = vmatpush2.msra.mxu0 0.0
    %407 = vmatprep.subr.mxu0 0.0
    %408 = vmatpush2.msra.mxu0 0.0
    %409 = vmatprep.subr.mxu0 0.0
    %410 = vmatpush2.msra.mxu0 0.0
    %411 = vmatprep.subr.mxu0 0.0
    %412 = vmatpush2.msra.mxu0 0.0
    %413 = vmatprep.subr.mxu0 0.0
    %414 = vmatpush2.msra.mxu0 0.0
    %415 = vmatprep.mubr.f32.mxu0 0.0
    %416 = vmatmul.mubr.f32.gmra.mxu0 %v349
    %v417 = vpop.f32.mrf.mxu0
    %v418 = vadd.f32 %v346, %v417
    %v419 = vpop.f32.mrf.mxu0
    %420 = vdwg.mxu0
    %vm421 = vcmask 97280
    %422 = vst.msk [vmem:[%s11] sm:$0xff] %vm421, %v418
    // Predicated region
    $region66: #{fwd.1} parent=1 // pred_check
      _
    $region67: #{fwd.1} parent=1 // pred_check_branch
      %424 = sbr.rel (0) target = $region69
    $region68: #{fwd.1} parent=1 // pred_region
      _
    $region69: #{fwd.1} parent=1 // pred_fallthru
      _
    // Predicated region
    $region70: #{fwd.1} parent=1 // pred_check
      _
    $region71: #{fwd.1} parent=1 // pred_check_branch
      %426 = sbr.rel (0) target = $region73
    $region72: #{fwd.1} parent=1 // pred_region
      _
    $region73: #{fwd.1} parent=1 // pred_fallthru
      _
    %427 = vsyncpa [#allocation3], 1
    %428 = vsyncpa [#allocation5], 1
    %429 = vsyncpa [#allocation8], 1

</llo_original>
